<compile_context>
chip_gen: v7x
topology: tpu7x:2x2x1
jax: 0.10.0
libtpu: 0.0.40
codegen_flags: <defaults>
</compile_context>

<pallas_src>
import functools

import jax
import jax.numpy as jnp
from jax.experimental import pallas as pl
from jax.experimental.pallas import tpu as pltpu

ALPHA = 0.25
GAMMA = 2.0
SMOOTH = 1e-6
DICE_WEIGHT = 0.5

_SUBLANE_SPLIT = 8          # rows per batch so vreg sublanes are always full
_PAD_LOGIT = -20000.0       # sigmoid -> 0, bce -> 0, focal -> 0 (exact zeros)


def _focal_dice_kernel(x_ref, y_ref, inter_ref, psum_ref, ysum_ref, fsum_ref,
                       *, alpha, gamma):
    k = pl.program_id(1)          # reduction axis (arbitrary)

    @pl.when(k == 0)
    def _init():
        inter_ref[...] = jnp.zeros_like(inter_ref)
        psum_ref[...] = jnp.zeros_like(psum_ref)
        ysum_ref[...] = jnp.zeros_like(ysum_ref)
        fsum_ref[...] = jnp.zeros_like(fsum_ref)

    x = x_ref[...].astype(jnp.float32)
    y = y_ref[...].astype(jnp.float32)

    # sigmoid via tanh: a single EUP op instead of exp + reciprocal.
    p = 0.5 * jnp.tanh(0.5 * x) + 0.5

    # BCE(sigmoid(x), y) in the numerically-stable logits form.
    # TODO(synk): PyTorch's F.binary_cross_entropy clamps log terms at -100;
    # that only differs for |logit| > ~100 and is omitted here.
    bce = jnp.maximum(x, 0.0) - x * y + jnp.log1p(jnp.exp(-jnp.abs(x)))
    t = 1.0 - jnp.exp(-bce)
    if gamma == 2.0:
        focal = (alpha * bce) * (t * t)
    else:
        focal = (alpha * bce) * jnp.power(t, gamma)

    inter_ref[...] += jnp.sum(y * p, axis=1, keepdims=True)
    psum_ref[...] += jnp.sum(p, axis=1, keepdims=True)
    ysum_ref[...] += jnp.sum(y, axis=1, keepdims=True)
    fsum_ref[...] += jnp.sum(focal, axis=1, keepdims=True)


def focal_dice_loss(y_pred, y_true, alpha=ALPHA, gamma=GAMMA, smooth=SMOOTH,
                    dice_weight=DICE_WEIGHT):
    B = y_pred.shape[0]
    K = 1
    for d in y_pred.shape[1:]:
        K *= int(d)

    # Keep native dtypes (no HBM up-cast); cast to f32 inside the kernel only.
    x = y_pred.reshape(B, K)
    y = y_true.reshape(B, K)

    # Sublane packing: split each batch row into R rows so vregs are full.
    R = _SUBLANE_SPLIT
    unit = R * 128
    K_pad = ((K + unit - 1) // unit) * unit
    if K_pad != K:
        pad = K_pad - K
        # Padded logits map to p = 0, bce = 0, focal = 0: zero contribution.
        x = jnp.pad(x, ((0, 0), (0, pad)), constant_values=_PAD_LOGIT)
        y = jnp.pad(y, ((0, 0), (0, pad)), constant_values=0)
    rows = B * R
    Kp = K_pad // R
    x = x.reshape(rows, Kp)
    y = y.reshape(rows, Kp)

    # Tile selection: ~4 MiB of streamed input (x + y) per block, lane-aligned,
    # dividing Kp exactly (no in-kernel tail masking needed).
    bytes_per_col = rows * (x.dtype.itemsize + y.dtype.itemsize)
    target_block_bytes = 4 * 1024 * 1024
    max_tk = max(128, (target_block_bytes // bytes_per_col) // 128 * 128)
    d = Kp // 128
    best = 1
    for cand in range(1, d + 1):
        if d % cand == 0 and 128 * cand <= max_tk:
            best = cand
    tk = 128 * best
    nk = Kp // tk

    # Leading "parallel" axis: splits the K reduction into independent halves
    # (2nd TensorCore on v7x; size-1 / no-op on v5e, v6e, or when nk is odd).
    ncores = 2 if (nk % 2 == 0 and nk >= 2) else 1
    nkc = nk // ncores
    grid = (ncores, nkc)

    in_spec = pl.BlockSpec((rows, tk), lambda c, k: (0, c * nkc + k))
    out_spec = pl.BlockSpec((rows, 1), lambda c, k: (c, 0))
    out_shape = jax.ShapeDtypeStruct((ncores * rows, 1), jnp.float32)

    blk_bytes = rows * tk * (x.dtype.itemsize + y.dtype.itemsize)
    vmem_limit = int(min(64 * 1024 * 1024,
                         max(32 * 1024 * 1024, 2 * blk_bytes + 8 * 1024 * 1024)))

    kernel = functools.partial(_focal_dice_kernel,
                               alpha=float(alpha), gamma=float(gamma))

    inter, psum, ysum, fsum = pl.pallas_call(
        kernel,
        out_shape=[out_shape] * 4,
        grid_spec=pltpu.PrefetchScalarGridSpec(
            num_scalar_prefetch=0,
            grid=grid,
            in_specs=[in_spec, in_spec],
            out_specs=[out_spec] * 4,
        ),
        compiler_params=pltpu.CompilerParams(
            dimension_semantics=("parallel", "arbitrary"),
            vmem_limit_bytes=vmem_limit),
    )(x, y)

    # Tiny scalar epilogue in plain JAX.
    def per_batch(a):
        return jnp.sum(a.reshape(ncores, B, R), axis=(0, 2))

    inter_b = per_batch(inter)
    psum_b = per_batch(psum)
    ysum_b = per_batch(ysum)
    focal_total = jnp.sum(fsum)

    dice_coeff = (2.0 * inter_b + smooth) / (ysum_b + psum_b + smooth)
    dice_loss = 1.0 - jnp.mean(dice_coeff)
    focal_loss = focal_total / (B * K)   # mean over the true element count
    return dice_weight * dice_loss + (1.0 - dice_weight) * focal_loss


def _reference(y_pred, y_true, alpha=ALPHA, gamma=GAMMA, smooth=SMOOTH,
               dice_weight=DICE_WEIGHT):
    p = jax.nn.sigmoid(y_pred.astype(jnp.float32))
    y = y_true.astype(jnp.float32)
    red = tuple(range(1, y_pred.ndim))
    inter = jnp.sum(y * p, axis=red)
    dice = (2.0 * inter + smooth) / (jnp.sum(y, axis=red) +
                                     jnp.sum(p, axis=red) + smooth)
    dice_loss = 1.0 - jnp.mean(dice)
    log_p = jnp.maximum(jnp.log(p), -100.0)
    log_1mp = jnp.maximum(jnp.log1p(-p), -100.0)
    bce = -(y * log_p + (1.0 - y) * log_1mp)
    focal = alpha * (1.0 - jnp.exp(-bce)) ** gamma * bce
    focal_loss = jnp.mean(focal)
    return dice_weight * dice_loss + (1.0 - dice_weight) * focal_loss


if __name__ == "__main__":
    key = jax.random.PRNGKey(0)
    k1, k2, k3, k4 = jax.random.split(key, 4)

    # Segmentation logits / mask pair, NCHW.
    B, C, H, W = 2, 4, 16, 16
    y_pred = jax.random.normal(k1, (B, C, H, W), dtype=jnp.float32)
    y_true = jax.random.bernoulli(k2, 0.4, (B, C, H, W)).astype(jnp.float32)

    loss = jax.block_until_ready(focal_dice_loss(y_pred, y_true))
    ref = _reference(y_pred, y_true)
    assert jnp.allclose(loss, ref, rtol=5e-5, atol=1e-6), (loss, ref)

    # Lane-unaligned shape exercising the zero-contribution padding path.
    y_pred2 = jax.random.normal(k3, (2, 3, 15, 15), dtype=jnp.float32)
    y_true2 = jax.random.bernoulli(k4, 0.3, (2, 3, 15, 15)).astype(jnp.float32)
    loss2 = jax.block_until_ready(focal_dice_loss(y_pred2, y_true2))
    ref2 = _reference(y_pred2, y_true2)
    assert jnp.allclose(loss2, ref2, rtol=5e-5, atol=1e-6), (loss2, ref2)

    print("KERNEL_OK")
</pallas_src>

<mosaic_0001>
module attributes {stable_mosaic.version = 11 : i64} {
  func.func @_focal_dice_kernel(%arg0: i32, %arg1: i32, %arg2: memref<16x128xf32, #tpu.memory_space<vmem>>, %arg3: memref<16x128xf32, #tpu.memory_space<vmem>>, %arg4: memref<16x1xf32, #tpu.memory_space<vmem>>, %arg5: memref<16x1xf32, #tpu.memory_space<vmem>>, %arg6: memref<16x1xf32, #tpu.memory_space<vmem>>, %arg7: memref<16x1xf32, #tpu.memory_space<vmem>>) attributes {dimension_semantics = [#tpu.dimension_semantics<parallel>, #tpu.dimension_semantics<arbitrary>], iteration_bounds = array<i64: 1, 1>, scalar_prefetch = 0 : i64, scratch_operands = 0 : i64, tpu.core_type = #tpu.core_type<tc>, window_params = [{transform_indices = @transform_0, window_bounds = array<i64: 16, 128>}, {transform_indices = @transform_1, window_bounds = array<i64: 16, 128>}, {transform_indices = @transform_2, window_bounds = array<i64: 16, 1>}, {transform_indices = @transform_3, window_bounds = array<i64: 16, 1>}, {transform_indices = @transform_4, window_bounds = array<i64: 16, 1>}, {transform_indices = @transform_5, window_bounds = array<i64: 16, 1>}]} {
    %c0_i32 = arith.constant 0 : i32
    %0 = arith.cmpi eq, %arg1, %c0_i32 : i32
    %1 = arith.extui %0 : i1 to i32
    %c0_i32_0 = arith.constant 0 : i32
    %2 = arith.cmpi ne, %1, %c0_i32_0 : i32
    scf.if %2 {
      %cst_31 = arith.constant 0.000000e+00 : f32
      %52 = vector.broadcast %cst_31 : f32 to vector<16x1xf32>
      %c0_32 = arith.constant 0 : index
      %c0_33 = arith.constant 0 : index
      %53 = vector.load %arg4[%c0_32, %c0_33] : memref<16x1xf32, #tpu.memory_space<vmem>>, vector<16x1xf32>
      tpu.vector_store %arg4[%c0_32, %c0_33], %52 {strides = array<i32>} : memref<16x1xf32, #tpu.memory_space<vmem>>, vector<16x1xf32>,
      %cst_34 = arith.constant 0.000000e+00 : f32
      %54 = vector.broadcast %cst_34 : f32 to vector<16x1xf32>
      %c0_35 = arith.constant 0 : index
      %c0_36 = arith.constant 0 : index
      %55 = vector.load %arg5[%c0_35, %c0_36] : memref<16x1xf32, #tpu.memory_space<vmem>>, vector<16x1xf32>
      tpu.vector_store %arg5[%c0_35, %c0_36], %54 {strides = array<i32>} : memref<16x1xf32, #tpu.memory_space<vmem>>, vector<16x1xf32>,
      %cst_37 = arith.constant 0.000000e+00 : f32
      %56 = vector.broadcast %cst_37 : f32 to vector<16x1xf32>
      %c0_38 = arith.constant 0 : index
      %c0_39 = arith.constant 0 : index
      %57 = vector.load %arg6[%c0_38, %c0_39] : memref<16x1xf32, #tpu.memory_space<vmem>>, vector<16x1xf32>
      tpu.vector_store %arg6[%c0_38, %c0_39], %56 {strides = array<i32>} : memref<16x1xf32, #tpu.memory_space<vmem>>, vector<16x1xf32>,
      %cst_40 = arith.constant 0.000000e+00 : f32
      %58 = vector.broadcast %cst_40 : f32 to vector<16x1xf32>
      %c0_41 = arith.constant 0 : index
      %c0_42 = arith.constant 0 : index
      %59 = vector.load %arg7[%c0_41, %c0_42] : memref<16x1xf32, #tpu.memory_space<vmem>>, vector<16x1xf32>
      tpu.vector_store %arg7[%c0_41, %c0_42], %58 {strides = array<i32>} : memref<16x1xf32, #tpu.memory_space<vmem>>, vector<16x1xf32>,
    } else {
    }
    %c0 = arith.constant 0 : index
    %c0_1 = arith.constant 0 : index
    %3 = vector.load %arg2[%c0, %c0_1] : memref<16x128xf32, #tpu.memory_space<vmem>>, vector<16x128xf32>
    %c0_2 = arith.constant 0 : index
    %c0_3 = arith.constant 0 : index
    %4 = vector.load %arg3[%c0_2, %c0_3] : memref<16x128xf32, #tpu.memory_space<vmem>>, vector<16x128xf32>
    %cst = arith.constant 5.000000e-01 : f32
    %5 = vector.broadcast %cst : f32 to vector<16x128xf32>
    %6 = arith.mulf %5, %3 : vector<16x128xf32>
    %7 = math.tanh %6 : vector<16x128xf32>
    %cst_4 = arith.constant 5.000000e-01 : f32
    %8 = vector.broadcast %cst_4 : f32 to vector<16x128xf32>
    %9 = arith.mulf %8, %7 : vector<16x128xf32>
    %cst_5 = arith.constant 5.000000e-01 : f32
    %10 = vector.broadcast %cst_5 : f32 to vector<16x128xf32>
    %11 = arith.addf %9, %10 : vector<16x128xf32>
    %cst_6 = arith.constant 0.000000e+00 : f32
    %12 = vector.broadcast %cst_6 : f32 to vector<16x128xf32>
    %13 = arith.maximumf %3, %12 : vector<16x128xf32>
    %14 = arith.mulf %3, %4 : vector<16x128xf32>
    %15 = arith.subf %13, %14 : vector<16x128xf32>
    %16 = math.absf %3 : vector<16x128xf32>
    %cst_7 = arith.constant 0.000000e+00 : f32
    %17 = vector.broadcast %cst_7 : f32 to vector<16x128xf32>
    %18 = arith.subf %17, %16 : vector<16x128xf32>
    %19 = math.exp %18 : vector<16x128xf32>
    %20 = math.log1p %19 : vector<16x128xf32>
    %21 = arith.addf %15, %20 : vector<16x128xf32>
    %cst_8 = arith.constant 0.000000e+00 : f32
    %22 = vector.broadcast %cst_8 : f32 to vector<16x128xf32>
    %23 = arith.subf %22, %21 : vector<16x128xf32>
    %24 = math.exp %23 : vector<16x128xf32>
    %cst_9 = arith.constant 1.000000e+00 : f32
    %25 = vector.broadcast %cst_9 : f32 to vector<16x128xf32>
    %26 = arith.subf %25, %24 : vector<16x128xf32>
    %cst_10 = arith.constant 2.500000e-01 : f32
    %27 = vector.broadcast %cst_10 : f32 to vector<16x128xf32>
    %28 = arith.mulf %27, %21 : vector<16x128xf32>
    %29 = arith.mulf %26, %26 : vector<16x128xf32>
    %30 = arith.mulf %28, %29 : vector<16x128xf32>
    %c0_11 = arith.constant 0 : index
    %c0_12 = arith.constant 0 : index
    %31 = vector.load %arg4[%c0_11, %c0_12] : memref<16x1xf32, #tpu.memory_space<vmem>>, vector<16x1xf32>
    %32 = arith.mulf %4, %11 : vector<16x128xf32>
    %cst_13 = arith.constant dense<0.000000e+00> : vector<16xf32>
    %33 = vector.multi_reduction <add>, %32, %cst_13 [1] : vector<16x128xf32> to vector<16xf32>
    %34 = vector.shape_cast %33 : vector<16xf32> to vector<16x1xf32>
    %35 = arith.addf %31, %34 : vector<16x1xf32>
    %c0_14 = arith.constant 0 : index
    %c0_15 = arith.constant 0 : index
    %36 = vector.load %arg4[%c0_14, %c0_15] : memref<16x1xf32, #tpu.memory_space<vmem>>, vector<16x1xf32>
    tpu.vector_store %arg4[%c0_14, %c0_15], %35 {strides = array<i32>} : memref<16x1xf32, #tpu.memory_space<vmem>>, vector<16x1xf32>,
    %c0_16 = arith.constant 0 : index
    %c0_17 = arith.constant 0 : index
    %37 = vector.load %arg5[%c0_16, %c0_17] : memref<16x1xf32, #tpu.memory_space<vmem>>, vector<16x1xf32>
    %cst_18 = arith.constant dense<0.000000e+00> : vector<16xf32>
    %38 = vector.multi_reduction <add>, %11, %cst_18 [1] : vector<16x128xf32> to vector<16xf32>
    %39 = vector.shape_cast %38 : vector<16xf32> to vector<16x1xf32>
    %40 = arith.addf %37, %39 : vector<16x1xf32>
    %c0_19 = arith.constant 0 : index
    %c0_20 = arith.constant 0 : index
    %41 = vector.load %arg5[%c0_19, %c0_20] : memref<16x1xf32, #tpu.memory_space<vmem>>, vector<16x1xf32>
    tpu.vector_store %arg5[%c0_19, %c0_20], %40 {strides = array<i32>} : memref<16x1xf32, #tpu.memory_space<vmem>>, vector<16x1xf32>,
    %c0_21 = arith.constant 0 : index
    %c0_22 = arith.constant 0 : index
    %42 = vector.load %arg6[%c0_21, %c0_22] : memref<16x1xf32, #tpu.memory_space<vmem>>, vector<16x1xf32>
    %cst_23 = arith.constant dense<0.000000e+00> : vector<16xf32>
    %43 = vector.multi_reduction <add>, %4, %cst_23 [1] : vector<16x128xf32> to vector<16xf32>
    %44 = vector.shape_cast %43 : vector<16xf32> to vector<16x1xf32>
    %45 = arith.addf %42, %44 : vector<16x1xf32>
    %c0_24 = arith.constant 0 : index
    %c0_25 = arith.constant 0 : index
    %46 = vector.load %arg6[%c0_24, %c0_25] : memref<16x1xf32, #tpu.memory_space<vmem>>, vector<16x1xf32>
    tpu.vector_store %arg6[%c0_24, %c0_25], %45 {strides = array<i32>} : memref<16x1xf32, #tpu.memory_space<vmem>>, vector<16x1xf32>,
    %c0_26 = arith.constant 0 : index
    %c0_27 = arith.constant 0 : index
    %47 = vector.load %arg7[%c0_26, %c0_27] : memref<16x1xf32, #tpu.memory_space<vmem>>, vector<16x1xf32>
    %cst_28 = arith.constant dense<0.000000e+00> : vector<16xf32>
    %48 = vector.multi_reduction <add>, %30, %cst_28 [1] : vector<16x128xf32> to vector<16xf32>
    %49 = vector.shape_cast %48 : vector<16xf32> to vector<16x1xf32>
    %50 = arith.addf %47, %49 : vector<16x1xf32>
    %c0_29 = arith.constant 0 : index
    %c0_30 = arith.constant 0 : index
    %51 = vector.load %arg7[%c0_29, %c0_30] : memref<16x1xf32, #tpu.memory_space<vmem>>, vector<16x1xf32>
    tpu.vector_store %arg7[%c0_29, %c0_30], %50 {strides = array<i32>} : memref<16x1xf32, #tpu.memory_space<vmem>>, vector<16x1xf32>,
    return
  }
  func.func @transform_0(%arg0: i32, %arg1: i32) -> (i32, i32) {
    %c1_i32 = arith.constant 1 : i32
    %0 = arith.muli %arg0, %c1_i32 : i32
    %1 = arith.addi %0, %arg1 : i32
    %c0_i32 = arith.constant 0 : i32
    %c0_i32_0 = arith.constant 0 : i32
    return %c0_i32, %1 : i32, i32
  }
  func.func @transform_1(%arg0: i32, %arg1: i32) -> (i32, i32) {
    %c1_i32 = arith.constant 1 : i32
    %0 = arith.muli %arg0, %c1_i32 : i32
    %1 = arith.addi %0, %arg1 : i32
    %c0_i32 = arith.constant 0 : i32
    %c0_i32_0 = arith.constant 0 : i32
    return %c0_i32, %1 : i32, i32
  }
  func.func @transform_2(%arg0: i32, %arg1: i32) -> (i32, i32) {
    %c0_i32 = arith.constant 0 : i32
    %c0_i32_0 = arith.constant 0 : i32
    return %arg0, %c0_i32 : i32, i32
  }
  func.func @transform_3(%arg0: i32, %arg1: i32) -> (i32, i32) {
    %c0_i32 = arith.constant 0 : i32
    %c0_i32_0 = arith.constant 0 : i32
    return %arg0, %c0_i32 : i32, i32
  }
  func.func @transform_4(%arg0: i32, %arg1: i32) -> (i32, i32) {
    %c0_i32 = arith.constant 0 : i32
    %c0_i32_0 = arith.constant 0 : i32
    return %arg0, %c0_i32 : i32, i32
  }
  func.func @transform_5(%arg0: i32, %arg1: i32) -> (i32, i32) {
    %c0_i32 = arith.constant 0 : i32
    %c0_i32_0 = arith.constant 0 : i32
    return %arg0, %c0_i32 : i32, i32
  }
}

</mosaic_0001>

<llo_original>
// kernel: tpu_custom_call.1
$region0: #{tpu_custom_call.1}
  #allocation0 [shape = 'u32[]', space=smem, size = 0x4, offset = 0x4, fixed_abs, tag = 'smem constant byte address 0x4 - core index']
  #allocation1 [shape = 'u32[144,128]{1,0:T(1,128)}', space=vmem, size = 0x12000, scoped, tag = 'internal scratch']
  %s0 = inlined_call_operand.hbm [shape: f32[16,128], index: 0, kind: input, shape index: {}]
  %s1 = inlined_call_operand.hbm [shape: f32[16,128], index: 1, kind: input, shape index: {}]
  %s2 = inlined_call_operand.vmem [shape: f32[16,1], index: 2, kind: output, shape index: {0}]
  %s3 = inlined_call_operand.vmem [shape: f32[16,1], index: 3, kind: output, shape index: {1}]
  %s4 = inlined_call_operand.vmem [shape: f32[16,1], index: 4, kind: output, shape index: {2}]
  %s5 = inlined_call_operand.vmem [shape: f32[16,1], index: 5, kind: output, shape index: {3}]
  %6 = xla_tuple %s2, %s3, %s4, %s5
  %s7 = sld [smem:[#allocation0]]
  $region54: #{tpu_custom_call.1} parent=0
    _
  %s9 = ssub.s32 1, %s7
  %s10 = scalar_select 0, %s9, %s7
  $region1: #{tpu_custom_call.1} parent=0
    #allocation2 [shape = 'u8[8192]{0}', space=vmem, size = 0x2000, scoped, tag = 'input window, operand 0, single buffered']
    #allocation3 [shape = 's32[1]{0}', space=sflag, size = 0x4, scoped, tag = 'scoped memory for tpu_custom_call.1']
    #allocation4 [shape = 'u8[8192]{0}', space=vmem, size = 0x2000, scoped, tag = 'input window, operand 1, single buffered']
    #allocation5 [shape = 's32[1]{0}', space=sflag, size = 0x4, scoped, tag = 'scoped memory for tpu_custom_call.1']
    %11 = vsyncpa [#allocation3], 0
    %12 = vsyncpa [#allocation5], 0
    // Predicated region
    $region2: #{tpu_custom_call.1} parent=1 // pred_check
      _
    $region3: #{tpu_custom_call.1} parent=1 // pred_check_branch
      %14 = sbr.rel (0) target = $region5
    $region4: #{tpu_custom_call.1} parent=1 // pred_region
      %s15 = sadd.s32 0, 0
      %s17 = ssub.s32 256, 256
      %18 = vsyncadd [#allocation3], %s17
      %s19 = smul.addr %s15, 128
      %s20 = scalar_lea.hbm %s0, %s19
      %s21 = sshll.u32 [#allocation2], 4
      %s22 = int_to_ptr.vmem [resolvable:$true] %s21
      %27 = dma.hbm_to_vmem [thread:$0]  %s20, 256, %s22, [#allocation3], 128, 128, 8
    $region5: #{tpu_custom_call.1} parent=1 // pred_fallthru
      _
    // Predicated region
    $region6: #{tpu_custom_call.1} parent=1 // pred_check
      _
    $region7: #{tpu_custom_call.1} parent=1 // pred_check_branch
      %29 = sbr.rel (0) target = $region9
    $region8: #{tpu_custom_call.1} parent=1 // pred_region
      %s30 = sadd.s32 0, 0
      %s32 = ssub.s32 256, 256
      %33 = vsyncadd [#allocation5], %s32
      %s34 = smul.addr %s30, 128
      %s35 = scalar_lea.hbm %s1, %s34
      %s36 = sshll.u32 [#allocation4], 4
      %s37 = int_to_ptr.vmem [resolvable:$true] %s36
      %42 = dma.hbm_to_vmem [thread:$0]  %s35, 256, %s37, [#allocation5], 128, 128, 8
    $region9: #{tpu_custom_call.1} parent=1 // pred_fallthru
      _
    // Predicated region
    $region10: #{tpu_custom_call.1} parent=1 // pred_check
      _
    $region11: #{tpu_custom_call.1} parent=1 // pred_check_branch
      %44 = sbr.rel (0) target = $region13
    $region12: #{tpu_custom_call.1} parent=1 // pred_region
      %45 = dma.done [#allocation3], 256
    $region13: #{tpu_custom_call.1} parent=1 // pred_fallthru
      _
    // Predicated region
    $region14: #{tpu_custom_call.1} parent=1 // pred_check
      _
    $region15: #{tpu_custom_call.1} parent=1 // pred_check_branch
      %47 = sbr.rel (0) target = $region17
    $region16: #{tpu_custom_call.1} parent=1 // pred_region
      %48 = dma.done [#allocation5], 256
    $region17: #{tpu_custom_call.1} parent=1 // pred_fallthru
      _
    %s49 = sadd.s32 0, 0
    %s50 = sadd.s32 0, 0
    %p51 = scmp.eq.s32.totalorder 0, 0
    // Predicated region
    $region18: #{tpu_custom_call.1} parent=1 // pred_check
      %p52 = pneg %p51
    $region19: #{tpu_custom_call.1} parent=1 // pred_check_branch
      %54 = sbr.rel (%p52) target = $region21
    $region20: #{tpu_custom_call.1} parent=1 // pred_region
      %vm55 = vcmask 7168
      %56 = vst.msk [vmem:[%s2] sm:$0xff] %vm55, 0.0
      %57 = vst.msk [vmem:[%s2 + $0x8] sm:$0xff] %vm55, 0.0
      %58 = vst.msk [vmem:[%s3] sm:$0xff] %vm55, 0.0
      %59 = vst.msk [vmem:[%s3 + $0x8] sm:$0xff] %vm55, 0.0
      %60 = vst.msk [vmem:[%s4] sm:$0xff] %vm55, 0.0
      %61 = vst.msk [vmem:[%s4 + $0x8] sm:$0xff] %vm55, 0.0
      %62 = vst.msk [vmem:[%s5] sm:$0xff] %vm55, 0.0
      %63 = vst.msk [vmem:[%s5 + $0x8] sm:$0xff] %vm55, 0.0
    $region21: #{tpu_custom_call.1} parent=1 // pred_fallthru
      _
    %v64 = vld [vmem:[#allocation2] sm:$0xff]
    %v65 = vld [vmem:[#allocation2 + $0x8] sm:$0xff]
    %v66 = vld [vmem:[#allocation4] sm:$0xff]
    %v67 = vld [vmem:[#allocation4 + $0x8] sm:$0xff]
    %v68 = vmul.f32 %v64, 0.5
    %v69 = vmul.f32 %v65, 0.5
    %v70 = vtanh.pop %v68
    %v71 = vtanh.pop %v69
    %v72 = vmul.f32 %v70, 0.5
    %v73 = vmul.f32 %v71, 0.5
    %v74 = vadd.f32 %v72, 0.5
    %v75 = vadd.f32 %v73, 0.5
    %v76 = vmax.f32 %v64, 0.0
    %v77 = vmax.f32 %v65, 0.0
    %v78 = vmul.f32 %v64, %v66
    %v79 = vmul.f32 %v65, %v67
    %v80 = vsub.f32 %v76, %v78
    %v81 = vsub.f32 %v77, %v79
    %v82 = vand.u32 2147483647, %v64
    %v83 = vand.u32 2147483647, %v65
    %v84 = vsub.f32 0.0, %v82
    %v85 = vsub.f32 0.0, %v83
    %v86 = vmul.f32 %v84, 1.442695
    %v87 = vpow.pop %v86
    %v88 = vmul.f32 %v85, 1.442695
    %v89 = vpow.pop %v88
    %v90 = vadd.f32 %v87, 1.0
    %v91 = vlog2.pop %v90
    %v92 = vmul.f32 %v91, 0.6931472
    %v93 = vmul.f32 -0.5, %v87
    %v94 = vadd.f32 %v93, 1.0
    %v95 = vmul.f32 %v94, %v87
    %v96 = vand.u32 2147483647, %v87
    %vm97 = vcmp.lt.f32.partialorder %v96, 0.0004427343
    %v98 = vsel %vm97, %v95, %v92
    %v99 = vadd.f32 %v89, 1.0
    %v100 = vlog2.pop %v99
    %v101 = vmul.f32 %v100, 0.6931472
    %v102 = vmul.f32 -0.5, %v89
    %v103 = vadd.f32 %v102, 1.0
    %v104 = vmul.f32 %v103, %v89
    %v105 = vand.u32 2147483647, %v89
    %vm106 = vcmp.lt.f32.partialorder %v105, 0.0004427343
    %v107 = vsel %vm106, %v104, %v101
    %v108 = vadd.f32 %v80, %v98
    %v109 = vadd.f32 %v81, %v107
    %v110 = vsub.f32 0.0, %v108
    %v111 = vsub.f32 0.0, %v109
    %v112 = vmul.f32 %v110, 1.442695
    %v113 = vpow.pop %v112
    %v114 = vmul.f32 %v111, 1.442695
    %v115 = vpow.pop %v114
    %v116 = vsub.f32 1.0, %v113
    %v117 = vsub.f32 1.0, %v115
    %v118 = vmul.f32 %v108, 0.25
    %v119 = vmul.f32 %v109, 0.25
    %v120 = vmul.f32 %v116, %v116
    %v121 = vmul.f32 %v117, %v117
    %v122 = vmul.f32 %v118, %v120
    %v123 = vmul.f32 %v119, %v121
    %v124 = vld [vmem:[%s2] sm:$0xff]
    %v125 = vld [vmem:[%s2 + $0x8] sm:$0xff]
    %v126 = vmul.f32 %v66, %v74
    %v127 = vmul.f32 %v67, %v75
    %128 = vadd.xlane.f32.xlu0 %v126
    %v129 = vpop.xlane.xlu0 %128
    %130 = vadd.xlane.f32.xlu0 %v127
    %v131 = vpop.xlane.xlu0 %130
    %v132 = vadd.f32 %v124, %v129
    %v133 = vadd.f32 %v125, %v131
    %vm134 = vcmask 7168
    %135 = vst.msk [vmem:[%s2] sm:$0xff] %vm134, %v132
    %136 = vst.msk [vmem:[%s2 + $0x8] sm:$0xff] %vm134, %v133
    %v137 = vld [vmem:[%s3] sm:$0xff]
    %v138 = vld [vmem:[%s3 + $0x8] sm:$0xff]
    %139 = vadd.xlane.f32.xlu0 %v74
    %v140 = vpop.xlane.xlu0 %139
    %141 = vadd.xlane.f32.xlu0 %v75
    %v142 = vpop.xlane.xlu0 %141
    %v143 = vadd.f32 %v137, %v140
    %v144 = vadd.f32 %v138, %v142
    %145 = vst.msk [vmem:[%s3] sm:$0xff] %vm134, %v143
    %146 = vst.msk [vmem:[%s3 + $0x8] sm:$0xff] %vm134, %v144
    %v147 = vld [vmem:[%s4] sm:$0xff]
    %v148 = vld [vmem:[%s4 + $0x8] sm:$0xff]
    %149 = vadd.xlane.f32.xlu0 %v66
    %v150 = vpop.xlane.xlu0 %149
    %151 = vadd.xlane.f32.xlu0 %v67
    %v152 = vpop.xlane.xlu0 %151
    %v153 = vadd.f32 %v147, %v150
    %v154 = vadd.f32 %v148, %v152
    %155 = vst.msk [vmem:[%s4] sm:$0xff] %vm134, %v153
    %156 = vst.msk [vmem:[%s4 + $0x8] sm:$0xff] %vm134, %v154
    %v157 = vld [vmem:[%s5] sm:$0xff]
    %v158 = vld [vmem:[%s5 + $0x8] sm:$0xff]
    %159 = vadd.xlane.f32.xlu0 %v122
    %v160 = vpop.xlane.xlu0 %159
    %161 = vadd.xlane.f32.xlu0 %v123
    %v162 = vpop.xlane.xlu0 %161
    %v163 = vadd.f32 %v157, %v160
    %v164 = vadd.f32 %v158, %v162
    %165 = vst.msk [vmem:[%s5] sm:$0xff] %vm134, %v163
    %166 = vst.msk [vmem:[%s5 + $0x8] sm:$0xff] %vm134, %v164
    // Predicated region
    $region22: #{tpu_custom_call.1} parent=1 // pred_check
      _
    $region23: #{tpu_custom_call.1} parent=1 // pred_check_branch
      %168 = sbr.rel (0) target = $region25
    $region24: #{tpu_custom_call.1} parent=1 // pred_region
      _
    $region25: #{tpu_custom_call.1} parent=1 // pred_fallthru
      _
    // Predicated region
    $region26: #{tpu_custom_call.1} parent=1 // pred_check
      _
    $region27: #{tpu_custom_call.1} parent=1 // pred_check_branch
      %170 = sbr.rel (0) target = $region29
    $region28: #{tpu_custom_call.1} parent=1 // pred_region
      _
    $region29: #{tpu_custom_call.1} parent=1 // pred_fallthru
      _
    // Predicated region
    $region30: #{tpu_custom_call.1} parent=1 // pred_check
      _
    $region31: #{tpu_custom_call.1} parent=1 // pred_check_branch
      %172 = sbr.rel (0) target = $region33
    $region32: #{tpu_custom_call.1} parent=1 // pred_region
      _
    $region33: #{tpu_custom_call.1} parent=1 // pred_fallthru
      _
    // Predicated region
    $region34: #{tpu_custom_call.1} parent=1 // pred_check
      _
    $region35: #{tpu_custom_call.1} parent=1 // pred_check_branch
      %174 = sbr.rel (0) target = $region37
    $region36: #{tpu_custom_call.1} parent=1 // pred_region
      _
    $region37: #{tpu_custom_call.1} parent=1 // pred_fallthru
      _
    // Predicated region
    $region38: #{tpu_custom_call.1} parent=1 // pred_check
      _
    $region39: #{tpu_custom_call.1} parent=1 // pred_check_branch
      %176 = sbr.rel (0) target = $region41
    $region40: #{tpu_custom_call.1} parent=1 // pred_region
      _
    $region41: #{tpu_custom_call.1} parent=1 // pred_fallthru
      _
    // Predicated region
    $region42: #{tpu_custom_call.1} parent=1 // pred_check
      _
    $region43: #{tpu_custom_call.1} parent=1 // pred_check_branch
      %178 = sbr.rel (0) target = $region45
    $region44: #{tpu_custom_call.1} parent=1 // pred_region
      _
    $region45: #{tpu_custom_call.1} parent=1 // pred_fallthru
      _
    // Predicated region
    $region46: #{tpu_custom_call.1} parent=1 // pred_check
      _
    $region47: #{tpu_custom_call.1} parent=1 // pred_check_branch
      %180 = sbr.rel (0) target = $region49
    $region48: #{tpu_custom_call.1} parent=1 // pred_region
      _
    $region49: #{tpu_custom_call.1} parent=1 // pred_fallthru
      _
    // Predicated region
    $region50: #{tpu_custom_call.1} parent=1 // pred_check
      _
    $region51: #{tpu_custom_call.1} parent=1 // pred_check_branch
      %182 = sbr.rel (0) target = $region53
    $region52: #{tpu_custom_call.1} parent=1 // pred_region
      _
    $region53: #{tpu_custom_call.1} parent=1 // pred_fallthru
      _
    %183 = vsyncpa [#allocation3], 1
    %184 = vsyncpa [#allocation5], 1

</llo_original>
